<compile_context>
chip_gen: v7x
topology: tpu7x:2x2x1
jax: 0.10.0
libtpu: 0.0.40
codegen_flags: <defaults>
</compile_context>

<pallas_src>
import math
import functools

import jax
import jax.numpy as jnp
from jax.experimental import pallas as pl
from jax.experimental.pallas import tpu as pltpu


def _round_up(x, m):
    return ((x + m - 1) // m) * m


def _pick_tile(n, requested):
    """Return (tile, padded_extent): full-extent block if the dim is small,
    otherwise a 128-multiple tile (required for lane-dense blocks) plus padding."""
    if n <= requested:
        return n, n
    t = max(128, (requested // 128) * 128)
    return t, _round_up(n, t)


def _mhrsa_flash_kernel(x2_ref, x1_ref, wq_ref, wkv_ref, wo_ref, out_ref,
                        q_scr, m_scr, l_scr, acc_scr,
                        *, n_heads, c2, n1_valid, n1_padded, tile_n1):
    # Block shapes seen by the kernel:
    #   x2_ref : (1, TN2, C)    channel-last query tile
    #   x1_ref : (1, C, TN1)    channel-first key/value tile
    #   wq_ref : (C, H*C2)      pre-transposed, pre-scaled by 1/sqrt(C)
    #   wkv_ref: (2*H*C2, C)    [Wk ; Wv] stacked over heads
    #   wo_ref : (C, H*C2)      final 1x1 mixing conv weight
    #   out_ref: (1, C, TN2)    channel-first output tile (resident across j)
    # Scratch (persists across the j = N1-tile reduction axis):
    #   q_scr  : (TN2, H*C2)    queries for all heads (computed once at j == 0)
    #   m_scr  : (H, TN2, 1)    running row max       (f32)
    #   l_scr  : (H, TN2, 1)    running softmax denom (f32)
    #   acc_scr: (H, TN2, C2)   running P @ V^T       (f32)
    j = pl.program_id(2)
    cdt = x1_ref.dtype          # MXU input (compute) dtype
    hc2 = n_heads * c2

    @pl.when(j == 0)
    def _init():
        # Q for all heads, once per (b, N2-tile); scale already folded into wq.
        q = jnp.dot(x2_ref[0], wq_ref[...], preferred_element_type=jnp.float32)
        q_scr[...] = q.astype(q_scr.dtype)
        m_scr[...] = jnp.full_like(m_scr, -jnp.inf)
        l_scr[...] = jnp.zeros_like(l_scr)
        acc_scr[...] = jnp.zeros_like(acc_scr)

    # K and V for all heads in a single (2*H*C2, C) @ (C, TN1) matmul.
    kv = jnp.dot(wkv_ref[...], x1_ref[0],
                 preferred_element_type=jnp.float32).astype(cdt)

    q_all = q_scr[...]                                          # (TN2, H*C2)

    # Mask zero-padded key columns (only emitted when N1 was actually padded).
    if n1_padded != n1_valid:
        col = jax.lax.broadcasted_iota(jnp.int32, (1, kv.shape[1]), 1) + j * tile_n1
        key_valid = col < n1_valid                              # (1, TN1)
    else:
        key_valid = None

    for h in range(n_heads):
        q_h = q_all[:, h * c2:(h + 1) * c2]                     # (TN2, C2)
        k_h = kv[h * c2:(h + 1) * c2, :]                        # (C2, TN1)
        v_h = kv[hc2 + h * c2: hc2 + (h + 1) * c2, :]           # (C2, TN1)

        # Energy tile (NN matmul); 1/sqrt(C) already folded into wq.
        s = jnp.dot(q_h, k_h, preferred_element_type=jnp.float32)   # (TN2, TN1)
        if key_valid is not None:
            s = jnp.where(key_valid, s, -1e30)

        # Online softmax update.
        m_prev = m_scr[h]                                       # (TN2, 1)
        m_new = jnp.maximum(m_prev, jnp.max(s, axis=-1, keepdims=True))
        alpha = jnp.exp(m_prev - m_new)                         # (TN2, 1)
        p = jnp.exp(s - m_new)                                  # (TN2, TN1) f32

        l_scr[h] = alpha * l_scr[h] + jnp.sum(p, axis=-1, keepdims=True)
        m_scr[h] = m_new

        # P @ V^T as an NT matmul (contract the TN1 axes) -> (TN2, C2)
        pv = jax.lax.dot_general(p.astype(cdt), v_h,
                                 (((1,), (1,)), ((), ())),
                                 preferred_element_type=jnp.float32)
        acc_scr[h] = alpha * acc_scr[h] + pv

    @pl.when(j == pl.num_programs(2) - 1)
    def _finalize():
        parts = []
        for h in range(n_heads):
            inv_l = pl.reciprocal(l_scr[h], approx=True)        # EUP, not VPU
            parts.append(acc_scr[h] * inv_l)
        att = jnp.concatenate(parts, axis=-1).astype(cdt)       # (TN2, H*C2)
        # Final 1x1 mixing conv for all heads as one NT matmul -> channel-first (C, TN2)
        mixed = jax.lax.dot_general(wo_ref[...], att,
                                    (((1,), (1,)), ((), ())),
                                    preferred_element_type=jnp.float32)
        out_ref[0] = mixed.astype(out_ref.dtype)                # single store per tile


def multi_head_rs_attention(x1, x2, wq, wk, wv, wout, *,
                            compute_dtype=jnp.bfloat16,
                            block_n2=256, block_n1=512):
    """
    Args (PyTorch conventions):
      x1:   (B, C, N1)  -- keys / values source
      x2:   (B, C, N2)  -- queries source
      wq/wk/wv: (H, C//2, C)   per-head 1x1 conv weights (no bias)
      wout: (C, H * C//2)      final 1x1 conv weight (no bias)
    Returns:
      (B, C, N2) float32
    """
    B, C, N1 = x1.shape
    N2 = x2.shape[2]
    H, C2, _ = wq.shape
    HC2 = H * C2

    tn2, n2p = _pick_tile(N2, block_n2)
    tn1, n1p = _pick_tile(N1, block_n1)

    # Only the (usually smaller) query tensor is transposed to channel-last; x1 and the
    # output stay channel-first -> lane-dense output stores, no output transpose.
    x2t = jnp.transpose(x2, (0, 2, 1))                          # (B, N2, C)
    if n2p != N2:
        x2t = jnp.pad(x2t, ((0, 0), (0, n2p - N2), (0, 0)))
    x1p = x1 if n1p == N1 else jnp.pad(x1, ((0, 0), (0, 0), (0, n1p - N1)))
    x2t = x2t.astype(compute_dtype)
    x1p = x1p.astype(compute_dtype)

    # Weights re-arranged once in the wrapper (no in-kernel transposes);
    # 1/sqrt(C) folded into Wq.
    scale = 1.0 / math.sqrt(C)
    wq_t = (wq.reshape(HC2, C) * scale).T.astype(compute_dtype)             # (C, HC2)
    w_kv = jnp.concatenate([wk.reshape(HC2, C), wv.reshape(HC2, C)],
                           axis=0).astype(compute_dtype)                    # (2*HC2, C)
    wo_c = wout.astype(compute_dtype)                                       # (C, HC2)

    kernel = functools.partial(
        _mhrsa_flash_kernel, n_heads=H, c2=C2,
        n1_valid=N1, n1_padded=n1p, tile_n1=tn1)

    out = pl.pallas_call(
        kernel,
        out_shape=jax.ShapeDtypeStruct((B, C, n2p), jnp.float32),
        grid_spec=pltpu.PrefetchScalarGridSpec(
            num_scalar_prefetch=0,
            grid=(B, n2p // tn2, n1p // tn1),       # N1 tiles innermost (reduction)
            in_specs=[
                pl.BlockSpec((1, tn2, C), lambda b, i, j: (b, i, 0)),       # x2 (q)
                pl.BlockSpec((1, C, tn1), lambda b, i, j: (b, 0, j)),       # x1 (k, v)
                pl.BlockSpec((C, HC2), lambda b, i, j: (0, 0)),             # wq  (resident)
                pl.BlockSpec((2 * HC2, C), lambda b, i, j: (0, 0)),         # wkv (resident)
                pl.BlockSpec((C, HC2), lambda b, i, j: (0, 0)),             # wout(resident)
            ],
            out_specs=pl.BlockSpec((1, C, tn2), lambda b, i, j: (b, 0, i)),
            scratch_shapes=[
                pltpu.VMEM((tn2, HC2), compute_dtype),      # Q for all heads
                pltpu.VMEM((H, tn2, 1), jnp.float32),       # running max
                pltpu.VMEM((H, tn2, 1), jnp.float32),       # running denom
                pltpu.VMEM((H, tn2, C2), jnp.float32),      # running P@V^T
            ]),
        compiler_params=pltpu.CompilerParams(
            dimension_semantics=("parallel", "parallel", "arbitrary"),
            vmem_limit_bytes=48 * 1024 * 1024),     # safe on v5e/v6e/v7x, > v5e default
    )(x2t, x1p, wq_t, w_kv, wo_c)

    return out if n2p == N2 else out[:, :, :N2]


def _reference(x1, x2, wq, wk, wv, wout):
    """Pure-JAX replica of the PyTorch forward, for verification."""
    C = x1.shape[1]
    outs = []
    for h in range(wq.shape[0]):
        q = jnp.einsum('oc,bcn->bon', wq[h], x2)                # (B, C2, N2)
        k = jnp.einsum('oc,bcn->bon', wk[h], x1)                # (B, C2, N1)
        v = jnp.einsum('oc,bcn->bon', wv[h], x1)                # (B, C2, N1)
        energy = jnp.einsum('bcm,bcn->bmn', q, k) / math.sqrt(C)
        energy = jax.nn.softmax(energy, axis=-1)
        o = jnp.einsum('bmn,bcn->bcm', energy, v)               # (B, C2, N2)
        outs.append(o)
    cat = jnp.concatenate(outs, axis=1)                         # (B, H*C2, N2)
    return jnp.einsum('oc,bcn->bon', wout, cat)                 # (B, C, N2)


if __name__ == "__main__":
    root = jax.random.PRNGKey(0)
    k_small, k_big = jax.random.split(root)

    def init(k, shape, fan_in):
        bound = 1.0 / math.sqrt(fan_in)
        return jax.random.uniform(k, shape, jnp.float32, -bound, bound)

    def make_case(key, B, C, N1, N2, H):
        C2 = C // 2
        ks = jax.random.split(key, 6)
        x1 = jax.random.normal(ks[0], (B, C, N1), jnp.float32)
        x2 = jax.random.normal(ks[1], (B, C, N2), jnp.float32)
        wq = init(ks[2], (H, C2, C), C)
        wk = init(ks[3], (H, C2, C), C)
        wv = init(ks[4], (H, C2, C), C)
        wout = init(ks[5], (C, H * C2), H * C2)
        return x1, x2, wq, wk, wv, wout

    def check(out, ref, atol, rtol, tag):
        assert out.shape == ref.shape, (tag, out.shape, ref.shape)
        err = float(jnp.max(jnp.abs(out - ref)))
        assert jnp.allclose(out, ref, atol=atol, rtol=rtol), f"{tag}: max abs err {err}"

    # Case 1: tiny shapes (single-tile path), f32 MXU inputs.
    # (tolerance bounded by the approx EUP reciprocal in the softmax normalization)
    args = make_case(k_small, B=2, C=4, N1=16, N2=8, H=2)
    ref = _reference(*args)
    out = jax.block_until_ready(
        multi_head_rs_attention(*args, compute_dtype=jnp.float32))
    check(out, ref, atol=2e-3, rtol=2e-2, tag="small/f32")

    # Case 2: same inputs, bf16 MXU inputs (optimized default).
    out = jax.block_until_ready(multi_head_rs_attention(*args))
    check(out, ref, atol=5e-3, rtol=5e-2, tag="small/bf16")

    # Case 3: tiled + padded flash path (N1, N2 larger than the block sizes), bf16.
    args = make_case(k_big, B=1, C=32, N1=300, N2=160, H=2)
    ref = _reference(*args)
    out = jax.block_until_ready(
        multi_head_rs_attention(*args, block_n2=128, block_n1=128))
    check(out, ref, atol=5e-3, rtol=5e-2, tag="tiled/bf16")

    print("KERNEL_OK")
</pallas_src>

<mosaic_0001>
module attributes {stable_mosaic.version = 11 : i64} {
  func.func @_mhrsa_flash_kernel(%arg0: i32, %arg1: i32, %arg2: i32, %arg3: memref<1x8x4xf32, #tpu.memory_space<vmem>>, %arg4: memref<1x4x16xf32, #tpu.memory_space<vmem>>, %arg5: memref<4x4xf32, #tpu.memory_space<vmem>>, %arg6: memref<8x4xf32, #tpu.memory_space<vmem>>, %arg7: memref<4x4xf32, #tpu.memory_space<vmem>>, %arg8: memref<1x4x8xf32, #tpu.memory_space<vmem>>, %arg9: memref<8x4xf32, #tpu.memory_space<vmem>>, %arg10: memref<2x8x1xf32, #tpu.memory_space<vmem>>, %arg11: memref<2x8x1xf32, #tpu.memory_space<vmem>>, %arg12: memref<2x8x2xf32, #tpu.memory_space<vmem>>) attributes {dimension_semantics = [#tpu.dimension_semantics<parallel>, #tpu.dimension_semantics<parallel>, #tpu.dimension_semantics<arbitrary>], iteration_bounds = array<i64: 2, 1, 1>, scalar_prefetch = 0 : i64, scratch_operands = 4 : i64, tpu.core_type = #tpu.core_type<tc>, window_params = [{transform_indices = @transform_0, window_bounds = array<i64: 1, 8, 4>}, {transform_indices = @transform_1, window_bounds = array<i64: 1, 4, 16>}, {pipeline_mode = #tpu.pipeline_mode<synchronous>, transform_indices = @transform_2, window_bounds = array<i64: 4, 4>}, {pipeline_mode = #tpu.pipeline_mode<synchronous>, transform_indices = @transform_3, window_bounds = array<i64: 8, 4>}, {pipeline_mode = #tpu.pipeline_mode<synchronous>, transform_indices = @transform_4, window_bounds = array<i64: 4, 4>}, {transform_indices = @transform_5, window_bounds = array<i64: 1, 4, 8>}]} {
    %c0_i32 = arith.constant 0 : i32
    %0 = arith.cmpi eq, %arg2, %c0_i32 : i32
    %1 = arith.extui %0 : i1 to i32
    %c0_i32_0 = arith.constant 0 : i32
    %2 = arith.cmpi ne, %1, %c0_i32_0 : i32
    scf.if %2 {
      %c0_52 = arith.constant 0 : index
      %c0_53 = arith.constant 0 : index
      %c0_54 = arith.constant 0 : index
      %81 = vector.load %arg3[%c0_52, %c0_53, %c0_54] : memref<1x8x4xf32, #tpu.memory_space<vmem>>, vector<1x8x4xf32>
      %82 = vector.shape_cast %81 : vector<1x8x4xf32> to vector<8x4xf32>
      %c0_55 = arith.constant 0 : index
      %c0_56 = arith.constant 0 : index
      %83 = vector.load %arg5[%c0_55, %c0_56] : memref<4x4xf32, #tpu.memory_space<vmem>>, vector<4x4xf32>
      %cst_57 = arith.constant dense<0.000000e+00> : vector<8x4xf32>
      %84 = tpu.matmul %82, %83, %cst_57 {dimension_numbers = #tpu.dot_dimension_numbers<[1], [0], [0], [1], [0, 0, 1, 1], [], []>} : vector<8x4xf32>, vector<4x4xf32>, vector<8x4xf32> -> vector<8x4xf32>
      %c0_58 = arith.constant 0 : index
      %c0_59 = arith.constant 0 : index
      %85 = vector.load %arg9[%c0_58, %c0_59] : memref<8x4xf32, #tpu.memory_space<vmem>>, vector<8x4xf32>
      tpu.vector_store %arg9[%c0_58, %c0_59], %84 {strides = array<i32>} : memref<8x4xf32, #tpu.memory_space<vmem>>, vector<8x4xf32>,
      %cst_60 = arith.constant 0xFF800000 : f32
      %86 = vector.broadcast %cst_60 : f32 to vector<2x8x1xf32>
      %c0_61 = arith.constant 0 : index
      %c0_62 = arith.constant 0 : index
      %c0_63 = arith.constant 0 : index
      %87 = vector.load %arg10[%c0_61, %c0_62, %c0_63] : memref<2x8x1xf32, #tpu.memory_space<vmem>>, vector<2x8x1xf32>
      tpu.vector_store %arg10[%c0_61, %c0_62, %c0_63], %86 {strides = array<i32>} : memref<2x8x1xf32, #tpu.memory_space<vmem>>, vector<2x8x1xf32>,
      %cst_64 = arith.constant 0.000000e+00 : f32
      %88 = vector.broadcast %cst_64 : f32 to vector<2x8x1xf32>
      %c0_65 = arith.constant 0 : index
      %c0_66 = arith.constant 0 : index
      %c0_67 = arith.constant 0 : index
      %89 = vector.load %arg11[%c0_65, %c0_66, %c0_67] : memref<2x8x1xf32, #tpu.memory_space<vmem>>, vector<2x8x1xf32>
      tpu.vector_store %arg11[%c0_65, %c0_66, %c0_67], %88 {strides = array<i32>} : memref<2x8x1xf32, #tpu.memory_space<vmem>>, vector<2x8x1xf32>,
      %cst_68 = arith.constant 0.000000e+00 : f32
      %90 = vector.broadcast %cst_68 : f32 to vector<2x8x2xf32>
      %c0_69 = arith.constant 0 : index
      %c0_70 = arith.constant 0 : index
      %c0_71 = arith.constant 0 : index
      %91 = vector.load %arg12[%c0_69, %c0_70, %c0_71] : memref<2x8x2xf32, #tpu.memory_space<vmem>>, vector<2x8x2xf32>
      tpu.vector_store %arg12[%c0_69, %c0_70, %c0_71], %90 {strides = array<i32>} : memref<2x8x2xf32, #tpu.memory_space<vmem>>, vector<2x8x2xf32>,
    } else {
    }
    %c0 = arith.constant 0 : index
    %c0_1 = arith.constant 0 : index
    %3 = vector.load %arg6[%c0, %c0_1] : memref<8x4xf32, #tpu.memory_space<vmem>>, vector<8x4xf32>
    %c0_2 = arith.constant 0 : index
    %c0_3 = arith.constant 0 : index
    %c0_4 = arith.constant 0 : index
    %4 = vector.load %arg4[%c0_2, %c0_3, %c0_4] : memref<1x4x16xf32, #tpu.memory_space<vmem>>, vector<1x4x16xf32>
    %5 = vector.shape_cast %4 : vector<1x4x16xf32> to vector<4x16xf32>
    %cst = arith.constant dense<0.000000e+00> : vector<8x16xf32>
    %6 = tpu.matmul %3, %5, %cst {dimension_numbers = #tpu.dot_dimension_numbers<[1], [0], [0], [1], [0, 0, 1, 1], [], []>} : vector<8x4xf32>, vector<4x16xf32>, vector<8x16xf32> -> vector<8x16xf32>
    %c0_5 = arith.constant 0 : index
    %c0_6 = arith.constant 0 : index
    %7 = vector.load %arg9[%c0_5, %c0_6] : memref<8x4xf32, #tpu.memory_space<vmem>>, vector<8x4xf32>
    %8 = vector.extract_strided_slice %7 {offsets = [0, 0], sizes = [8, 2], strides = [1, 1]} : vector<8x4xf32> to vector<8x2xf32>
    %9 = vector.extract_strided_slice %6 {offsets = [0, 0], sizes = [2, 16], strides = [1, 1]} : vector<8x16xf32> to vector<2x16xf32>
    %10 = vector.extract_strided_slice %6 {offsets = [4, 0], sizes = [2, 16], strides = [1, 1]} : vector<8x16xf32> to vector<2x16xf32>
    %cst_7 = arith.constant dense<0.000000e+00> : vector<8x16xf32>
    %11 = tpu.matmul %8, %9, %cst_7 {dimension_numbers = #tpu.dot_dimension_numbers<[1], [0], [0], [1], [0, 0, 1, 1], [], []>} : vector<8x2xf32>, vector<2x16xf32>, vector<8x16xf32> -> vector<8x16xf32>
    %c0_8 = arith.constant 0 : index
    %c0_9 = arith.constant 0 : index
    %c0_10 = arith.constant 0 : index
    %12 = vector.load %arg10[%c0_8, %c0_9, %c0_10] : memref<2x8x1xf32, #tpu.memory_space<vmem>>, vector<1x8x1xf32>
    %13 = vector.shape_cast %12 : vector<1x8x1xf32> to vector<8x1xf32>
    %cst_11 = arith.constant dense<0xFF800000> : vector<8xf32>
    %14 = vector.multi_reduction <maximumf>, %11, %cst_11 [1] : vector<8x16xf32> to vector<8xf32>
    %15 = vector.shape_cast %14 : vector<8xf32> to vector<8x1xf32>
    %16 = arith.maximumf %13, %15 : vector<8x1xf32>
    %17 = arith.subf %13, %16 : vector<8x1xf32>
    %18 = math.exp %17 : vector<8x1xf32>
    %19 = vector.broadcast %16 : vector<8x1xf32> to vector<8x16xf32>
    %20 = arith.subf %11, %19 : vector<8x16xf32>
    %21 = math.exp %20 : vector<8x16xf32>
    %c0_12 = arith.constant 0 : index
    %c0_13 = arith.constant 0 : index
    %c0_14 = arith.constant 0 : index
    %22 = vector.load %arg11[%c0_12, %c0_13, %c0_14] : memref<2x8x1xf32, #tpu.memory_space<vmem>>, vector<1x8x1xf32>
    %23 = vector.shape_cast %22 : vector<1x8x1xf32> to vector<8x1xf32>
    %24 = arith.mulf %18, %23 : vector<8x1xf32>
    %cst_15 = arith.constant dense<0.000000e+00> : vector<8xf32>
    %25 = vector.multi_reduction <add>, %21, %cst_15 [1] : vector<8x16xf32> to vector<8xf32>
    %26 = vector.shape_cast %25 : vector<8xf32> to vector<8x1xf32>
    %27 = arith.addf %24, %26 : vector<8x1xf32>
    %c0_16 = arith.constant 0 : index
    %c0_17 = arith.constant 0 : index
    %c0_18 = arith.constant 0 : index
    %28 = vector.load %arg11[%c0_16, %c0_17, %c0_18] : memref<2x8x1xf32, #tpu.memory_space<vmem>>, vector<1x8x1xf32>
    %29 = vector.shape_cast %28 : vector<1x8x1xf32> to vector<8x1xf32>
    %30 = vector.shape_cast %27 : vector<8x1xf32> to vector<1x8x1xf32>
    tpu.vector_store %arg11[%c0_16, %c0_17, %c0_18], %30 {strides = array<i32>} : memref<2x8x1xf32, #tpu.memory_space<vmem>>, vector<1x8x1xf32>,
    %c0_19 = arith.constant 0 : index
    %c0_20 = arith.constant 0 : index
    %c0_21 = arith.constant 0 : index
    %31 = vector.load %arg10[%c0_19, %c0_20, %c0_21] : memref<2x8x1xf32, #tpu.memory_space<vmem>>, vector<1x8x1xf32>
    %32 = vector.shape_cast %31 : vector<1x8x1xf32> to vector<8x1xf32>
    %33 = vector.shape_cast %16 : vector<8x1xf32> to vector<1x8x1xf32>
    tpu.vector_store %arg10[%c0_19, %c0_20, %c0_21], %33 {strides = array<i32>} : memref<2x8x1xf32, #tpu.memory_space<vmem>>, vector<1x8x1xf32>,
    %cst_22 = arith.constant dense<0.000000e+00> : vector<8x2xf32>
    %34 = tpu.matmul %21, %10, %cst_22 {dimension_numbers = #tpu.dot_dimension_numbers<[1], [1], [0], [0], [0, 0, 1, 0], [], []>} : vector<8x16xf32>, vector<2x16xf32>, vector<8x2xf32> -> vector<8x2xf32>
    %c0_23 = arith.constant 0 : index
    %c0_24 = arith.constant 0 : index
    %c0_25 = arith.constant 0 : index
    %35 = vector.load %arg12[%c0_23, %c0_24, %c0_25] : memref<2x8x2xf32, #tpu.memory_space<vmem>>, vector<1x8x2xf32>
    %36 = vector.shape_cast %35 : vector<1x8x2xf32> to vector<8x2xf32>
    %37 = vector.broadcast %18 : vector<8x1xf32> to vector<8x2xf32>
    %38 = arith.mulf %37, %36 : vector<8x2xf32>
    %39 = arith.addf %38, %34 : vector<8x2xf32>
    %c0_26 = arith.constant 0 : index
    %c0_27 = arith.constant 0 : index
    %c0_28 = arith.constant 0 : index
    %40 = vector.load %arg12[%c0_26, %c0_27, %c0_28] : memref<2x8x2xf32, #tpu.memory_space<vmem>>, vector<1x8x2xf32>
    %41 = vector.shape_cast %40 : vector<1x8x2xf32> to vector<8x2xf32>
    %42 = vector.shape_cast %39 : vector<8x2xf32> to vector<1x8x2xf32>
    tpu.vector_store %arg12[%c0_26, %c0_27, %c0_28], %42 {strides = array<i32>} : memref<2x8x2xf32, #tpu.memory_space<vmem>>, vector<1x8x2xf32>,
    %43 = vector.extract_strided_slice %7 {offsets = [0, 2], sizes = [8, 2], strides = [1, 1]} : vector<8x4xf32> to vector<8x2xf32>
    %44 = vector.extract_strided_slice %6 {offsets = [2, 0], sizes = [2, 16], strides = [1, 1]} : vector<8x16xf32> to vector<2x16xf32>
    %45 = vector.extract_strided_slice %6 {offsets = [6, 0], sizes = [2, 16], strides = [1, 1]} : vector<8x16xf32> to vector<2x16xf32>
    %cst_29 = arith.constant dense<0.000000e+00> : vector<8x16xf32>
    %46 = tpu.matmul %43, %44, %cst_29 {dimension_numbers = #tpu.dot_dimension_numbers<[1], [0], [0], [1], [0, 0, 1, 1], [], []>} : vector<8x2xf32>, vector<2x16xf32>, vector<8x16xf32> -> vector<8x16xf32>
    %c1 = arith.constant 1 : index
    %c0_30 = arith.constant 0 : index
    %c0_31 = arith.constant 0 : index
    %47 = vector.load %arg10[%c1, %c0_30, %c0_31] : memref<2x8x1xf32, #tpu.memory_space<vmem>>, vector<1x8x1xf32>
    %48 = vector.shape_cast %47 : vector<1x8x1xf32> to vector<8x1xf32>
    %cst_32 = arith.constant dense<0xFF800000> : vector<8xf32>
    %49 = vector.multi_reduction <maximumf>, %46, %cst_32 [1] : vector<8x16xf32> to vector<8xf32>
    %50 = vector.shape_cast %49 : vector<8xf32> to vector<8x1xf32>
    %51 = arith.maximumf %48, %50 : vector<8x1xf32>
    %52 = arith.subf %48, %51 : vector<8x1xf32>
    %53 = math.exp %52 : vector<8x1xf32>
    %54 = vector.broadcast %51 : vector<8x1xf32> to vector<8x16xf32>
    %55 = arith.subf %46, %54 : vector<8x16xf32>
    %56 = math.exp %55 : vector<8x16xf32>
    %c1_33 = arith.constant 1 : index
    %c0_34 = arith.constant 0 : index
    %c0_35 = arith.constant 0 : index
    %57 = vector.load %arg11[%c1_33, %c0_34, %c0_35] : memref<2x8x1xf32, #tpu.memory_space<vmem>>, vector<1x8x1xf32>
    %58 = vector.shape_cast %57 : vector<1x8x1xf32> to vector<8x1xf32>
    %59 = arith.mulf %53, %58 : vector<8x1xf32>
    %cst_36 = arith.constant dense<0.000000e+00> : vector<8xf32>
    %60 = vector.multi_reduction <add>, %56, %cst_36 [1] : vector<8x16xf32> to vector<8xf32>
    %61 = vector.shape_cast %60 : vector<8xf32> to vector<8x1xf32>
    %62 = arith.addf %59, %61 : vector<8x1xf32>
    %c1_37 = arith.constant 1 : index
    %c0_38 = arith.constant 0 : index
    %c0_39 = arith.constant 0 : index
    %63 = vector.load %arg11[%c1_37, %c0_38, %c0_39] : memref<2x8x1xf32, #tpu.memory_space<vmem>>, vector<1x8x1xf32>
    %64 = vector.shape_cast %63 : vector<1x8x1xf32> to vector<8x1xf32>
    %65 = vector.shape_cast %62 : vector<8x1xf32> to vector<1x8x1xf32>
    tpu.vector_store %arg11[%c1_37, %c0_38, %c0_39], %65 {strides = array<i32>} : memref<2x8x1xf32, #tpu.memory_space<vmem>>, vector<1x8x1xf32>,
    %c1_40 = arith.constant 1 : index
    %c0_41 = arith.constant 0 : index
    %c0_42 = arith.constant 0 : index
    %66 = vector.load %arg10[%c1_40, %c0_41, %c0_42] : memref<2x8x1xf32, #tpu.memory_space<vmem>>, vector<1x8x1xf32>
    %67 = vector.shape_cast %66 : vector<1x8x1xf32> to vector<8x1xf32>
    %68 = vector.shape_cast %51 : vector<8x1xf32> to vector<1x8x1xf32>
    tpu.vector_store %arg10[%c1_40, %c0_41, %c0_42], %68 {strides = array<i32>} : memref<2x8x1xf32, #tpu.memory_space<vmem>>, vector<1x8x1xf32>,
    %cst_43 = arith.constant dense<0.000000e+00> : vector<8x2xf32>
    %69 = tpu.matmul %56, %45, %cst_43 {dimension_numbers = #tpu.dot_dimension_numbers<[1], [1], [0], [0], [0, 0, 1, 0], [], []>} : vector<8x16xf32>, vector<2x16xf32>, vector<8x2xf32> -> vector<8x2xf32>
    %c1_44 = arith.constant 1 : index
    %c0_45 = arith.constant 0 : index
    %c0_46 = arith.constant 0 : index
    %70 = vector.load %arg12[%c1_44, %c0_45, %c0_46] : memref<2x8x2xf32, #tpu.memory_space<vmem>>, vector<1x8x2xf32>
    %71 = vector.shape_cast %70 : vector<1x8x2xf32> to vector<8x2xf32>
    %72 = vector.broadcast %53 : vector<8x1xf32> to vector<8x2xf32>
    %73 = arith.mulf %72, %71 : vector<8x2xf32>
    %74 = arith.addf %73, %69 : vector<8x2xf32>
    %c1_47 = arith.constant 1 : index
    %c0_48 = arith.constant 0 : index
    %c0_49 = arith.constant 0 : index
    %75 = vector.load %arg12[%c1_47, %c0_48, %c0_49] : memref<2x8x2xf32, #tpu.memory_space<vmem>>, vector<1x8x2xf32>
    %76 = vector.shape_cast %75 : vector<1x8x2xf32> to vector<8x2xf32>
    %77 = vector.shape_cast %74 : vector<8x2xf32> to vector<1x8x2xf32>
    tpu.vector_store %arg12[%c1_47, %c0_48, %c0_49], %77 {strides = array<i32>} : memref<2x8x2xf32, #tpu.memory_space<vmem>>, vector<1x8x2xf32>,
    %c0_i32_50 = arith.constant 0 : i32
    %78 = arith.cmpi eq, %arg2, %c0_i32_50 : i32
    %79 = arith.extui %78 : i1 to i32
    %c0_i32_51 = arith.constant 0 : i32
    %80 = arith.cmpi ne, %79, %c0_i32_51 : i32
    scf.if %80 {
      %c0_52 = arith.constant 0 : index
      %c0_53 = arith.constant 0 : index
      %c0_54 = arith.constant 0 : index
      %81 = vector.load %arg11[%c0_52, %c0_53, %c0_54] : memref<2x8x1xf32, #tpu.memory_space<vmem>>, vector<1x8x1xf32>
      %82 = vector.shape_cast %81 : vector<1x8x1xf32> to vector<8x1xf32>
      %83 = tpu.reciprocal %82 {approx = true} : vector<8x1xf32> -> vector<8x1xf32>
      %c0_55 = arith.constant 0 : index
      %c0_56 = arith.constant 0 : index
      %c0_57 = arith.constant 0 : index
      %84 = vector.load %arg12[%c0_55, %c0_56, %c0_57] : memref<2x8x2xf32, #tpu.memory_space<vmem>>, vector<1x8x2xf32>
      %85 = vector.shape_cast %84 : vector<1x8x2xf32> to vector<8x2xf32>
      %86 = vector.broadcast %83 : vector<8x1xf32> to vector<8x2xf32>
      %87 = arith.mulf %85, %86 : vector<8x2xf32>
      %c1_58 = arith.constant 1 : index
      %c0_59 = arith.constant 0 : index
      %c0_60 = arith.constant 0 : index
      %88 = vector.load %arg11[%c1_58, %c0_59, %c0_60] : memref<2x8x1xf32, #tpu.memory_space<vmem>>, vector<1x8x1xf32>
      %89 = vector.shape_cast %88 : vector<1x8x1xf32> to vector<8x1xf32>
      %90 = tpu.reciprocal %89 {approx = true} : vector<8x1xf32> -> vector<8x1xf32>
      %c1_61 = arith.constant 1 : index
      %c0_62 = arith.constant 0 : index
      %c0_63 = arith.constant 0 : index
      %91 = vector.load %arg12[%c1_61, %c0_62, %c0_63] : memref<2x8x2xf32, #tpu.memory_space<vmem>>, vector<1x8x2xf32>
      %92 = vector.shape_cast %91 : vector<1x8x2xf32> to vector<8x2xf32>
      %93 = vector.broadcast %90 : vector<8x1xf32> to vector<8x2xf32>
      %94 = arith.mulf %92, %93 : vector<8x2xf32>
      %95 = tpu.concatenate %87, %94 in 1 : vector<8x2xf32>, vector<8x2xf32> -> vector<8x4xf32>
      %c0_64 = arith.constant 0 : index
      %c0_65 = arith.constant 0 : index
      %96 = vector.load %arg7[%c0_64, %c0_65] : memref<4x4xf32, #tpu.memory_space<vmem>>, vector<4x4xf32>
      %cst_66 = arith.constant dense<0.000000e+00> : vector<4x8xf32>
      %97 = tpu.matmul %96, %95, %cst_66 {dimension_numbers = #tpu.dot_dimension_numbers<[1], [1], [0], [0], [0, 0, 1, 0], [], []>} : vector<4x4xf32>, vector<8x4xf32>, vector<4x8xf32> -> vector<4x8xf32>
      %c0_67 = arith.constant 0 : index
      %c0_68 = arith.constant 0 : index
      %c0_69 = arith.constant 0 : index
      %98 = vector.load %arg8[%c0_67, %c0_68, %c0_69] : memref<1x4x8xf32, #tpu.memory_space<vmem>>, vector<1x4x8xf32>
      %99 = vector.shape_cast %98 : vector<1x4x8xf32> to vector<4x8xf32>
      %100 = vector.shape_cast %97 : vector<4x8xf32> to vector<1x4x8xf32>
      tpu.vector_store %arg8[%c0_67, %c0_68, %c0_69], %100 {strides = array<i32>} : memref<1x4x8xf32, #tpu.memory_space<vmem>>, vector<1x4x8xf32>,
    } else {
    }
    return
  }
  func.func @transform_0(%arg0: i32, %arg1: i32, %arg2: i32) -> (i32, i32, i32) {
    %c0_i32 = arith.constant 0 : i32
    %c0_i32_0 = arith.constant 0 : i32
    return %arg0, %arg1, %c0_i32 : i32, i32, i32
  }
  func.func @transform_1(%arg0: i32, %arg1: i32, %arg2: i32) -> (i32, i32, i32) {
    %c0_i32 = arith.constant 0 : i32
    %c0_i32_0 = arith.constant 0 : i32
    return %arg0, %c0_i32, %arg2 : i32, i32, i32
  }
  func.func @transform_2(%arg0: i32, %arg1: i32, %arg2: i32) -> (i32, i32) {
    %c0_i32 = arith.constant 0 : i32
    %c0_i32_0 = arith.constant 0 : i32
    %c0_i32_1 = arith.constant 0 : i32
    return %c0_i32, %c0_i32_0 : i32, i32
  }
  func.func @transform_3(%arg0: i32, %arg1: i32, %arg2: i32) -> (i32, i32) {
    %c0_i32 = arith.constant 0 : i32
    %c0_i32_0 = arith.constant 0 : i32
    %c0_i32_1 = arith.constant 0 : i32
    return %c0_i32, %c0_i32_0 : i32, i32
  }
  func.func @transform_4(%arg0: i32, %arg1: i32, %arg2: i32) -> (i32, i32) {
    %c0_i32 = arith.constant 0 : i32
    %c0_i32_0 = arith.constant 0 : i32
    %c0_i32_1 = arith.constant 0 : i32
    return %c0_i32, %c0_i32_0 : i32, i32
  }
  func.func @transform_5(%arg0: i32, %arg1: i32, %arg2: i32) -> (i32, i32, i32) {
    %c0_i32 = arith.constant 0 : i32
    %c0_i32_0 = arith.constant 0 : i32
    return %arg0, %c0_i32, %arg1 : i32, i32, i32
  }
}

</mosaic_0001>

<llo_original>
// kernel: tpu_custom_call.1
$region0: #{tpu_custom_call.1}
  #allocation0 [shape = 'u32[]', space=smem, size = 0x4, offset = 0x4, fixed_abs, tag = 'smem constant byte address 0x4 - core index']
  #allocation1 [shape = 'u32[144,128]{1,0:T(1,128)}', space=vmem, size = 0x12000, scoped, tag = 'internal scratch']
  #allocation2 [shape = 'f32[8,4]{1,0:T(8,128)}', space=vmem, size = 0x1000, scoped, tag = 'scratch operand']
  #allocation3 [shape = 'f32[2,8,1]{2,1,0:T(8,128)}', space=vmem, size = 0x2000, scoped, tag = 'scratch operand']
  #allocation4 [shape = 'f32[2,8,1]{2,1,0:T(8,128)}', space=vmem, size = 0x2000, scoped, tag = 'scratch operand']
  #allocation5 [shape = 'f32[2,8,2]{2,1,0:T(8,128)}', space=vmem, size = 0x2000, scoped, tag = 'scratch operand']
  %s0 = inlined_call_operand.vmem [shape: f32[2,8,4], index: 0, kind: input, shape index: {}]
  %s1 = inlined_call_operand.vmem [shape: f32[2,4,16], index: 1, kind: input, shape index: {}]
  %s2 = inlined_call_operand.vmem [shape: f32[4,4], index: 2, kind: input, shape index: {}]
  %s3 = inlined_call_operand.vmem [shape: f32[8,4], index: 3, kind: input, shape index: {}]
  %s4 = inlined_call_operand.vmem [shape: f32[4,4], index: 4, kind: input, shape index: {}]
  %s5 = inlined_call_operand.hbm [shape: f32[2,4,8], index: 5, kind: output, shape index: {}]
  %s6 = sld [smem:[#allocation0]]
  $region61: #{tpu_custom_call.1} parent=0
    _
  %s8 = ssub.s32 1, %s6
  %s9 = scalar_select 0, %s8, %s6
  $region1: #{tpu_custom_call.1} parent=0
    #allocation6 [shape = 'u8[4096]{0}', space=vmem, size = 0x1000, scoped, tag = 'output window, operand 0']
    #allocation7 [shape = 's32[2]{0}', space=sflag, size = 0x8, scoped, tag = 'scoped memory for tpu_custom_call.1']
    %10 = vsyncpa [#allocation7], 0
    %s11 = scalar_lea.sflag [#allocation7], 1
    %12 = vsyncpa %s11, 0
    loop: start=0, step=1, limit=4
    $region2: #{tpu_custom_call.1} parent=1 // loop_pre_header
      _
    $region3: #{tpu_custom_call.1} parent=1 // loop_header
      %s14 = sphi 0, %s18
      %p15 = scmp.ge.s32.totalorder %s14, 4
      %s21 = sphi 0, %s40
      %s22 = sphi 0, %s36
      %s23 = sphi 0, %s32
      %s24 = sphi 0, %s21
      %s25 = sphi 0, %s22
      %s26 = sphi 0, %s23
      %s27 = sphi 0, %s24
      %s28 = sphi 0, %s25
      %s29 = sphi 0, %s26
      %s45 = sphi 0, %s47
      %s48 = sphi 0, %s45
      %s49 = sphi 0, %s48
      %s65 = sphi 0, %s49
      %s73 = sphi 0, %s75
      %s76 = sphi 0, %s73
      %s77 = sphi 0, %s76
      %s93 = sphi 0, %s77
      %s97 = sphi 0, %s97
      %s99 = sphi 0, %s97
      %s100 = sphi 0, %s99
      %s114 = sphi 0, %s100
      %s118 = sphi 0, %s118
      %s120 = sphi 0, %s118
      %s121 = sphi 0, %s120
      %s135 = sphi 0, %s121
      %s139 = sphi 0, %s139
      %s141 = sphi 0, %s139
      %s142 = sphi 0, %s141
      %s156 = sphi 0, %s142
      %s164 = sphi 0, %s166
      %s167 = sphi 0, %s164
      %s168 = sphi 0, %s167
      %s184 = sphi 0, %s168
    $region4: #{tpu_custom_call.1} parent=1 // loop_header_branch
      %17 = sbr.rel (%p15) target = $region8
    $region5: #{tpu_custom_call.1} parent=1 // loop_body
      %s19 = ssub.s32 %s14, 1
      %s20 = ssub.s32 %s14, 2
      %s30 = sadd.s32 1, %s23
      %p31 = scmp.ge.s32.totalorder %s30, 1
      %s32 = scalar_select %p31, 0, %s30
      %s33 = sadd.s32 1, %s22
      %s34 = scalar_select %p31, %s33, %s22
      %p35 = scmp.ge.s32.totalorder %s34, 1
      %s36 = scalar_select %p35, 0, %s34
      %s37 = sadd.s32 1, %s21
      %s38 = scalar_select %p35, %s37, %s21
      %p39 = scmp.ge.s32.totalorder %s38, 2
      %s40 = scalar_select %p39, 0, %s38
      %s41 = ssub.s32 %s21, %s40
      %s42 = ssub.s32 %s22, %s36
      %s43 = sor.u32 %s41, %s42
      %p44 = scmp.eq.s32.totalorder %s43, 0
      %s46 = sadd.s32 %s45, 1
      %s47 = scalar_select %p44, %s45, %s46
      %p50 = pneg %p44
      %p51 = scmp.eq.s32.totalorder %s14, 1
      %p52 = por %p50, %p51
      %p53 = scmp.ne.s32.totalorder %s45, %s48
      %p54 = scmp.eq.s32.totalorder %s14, 0
      %p55 = por %p53, %p54
      %p56 = scmp.ne.s32.totalorder %s45, %s48
      %p57 = scmp.eq.s32.totalorder %s19, 1
      %p58 = por %p56, %p57
      %p59 = scmp.ne.s32.totalorder %s48, %s49
      %p60 = scmp.eq.s32.totalorder %s19, 0
      %p61 = por %p59, %p60
      %p62 = scmp.ne.s32.totalorder %s48, %s49
      %p63 = scmp.eq.s32.totalorder %s20, 1
      %p64 = por %p62, %p63
      %p66 = scmp.ne.s32.totalorder %s49, %s65
      %p67 = scmp.eq.s32.totalorder %s20, 0
      %p68 = por %p66, %p67
      %s69 = ssub.s32 %s21, %s40
      %s70 = ssub.s32 %s23, %s32
      %s71 = sor.u32 %s69, %s70
      %p72 = scmp.eq.s32.totalorder %s71, 0
      %s74 = sadd.s32 %s73, 1
      %s75 = scalar_select %p72, %s73, %s74
      %p78 = pneg %p72
      %p79 = scmp.eq.s32.totalorder %s14, 1
      %p80 = por %p78, %p79
      %p81 = scmp.ne.s32.totalorder %s73, %s76
      %p82 = scmp.eq.s32.totalorder %s14, 0
      %p83 = por %p81, %p82
      %p84 = scmp.ne.s32.totalorder %s73, %s76
      %p85 = scmp.eq.s32.totalorder %s19, 1
      %p86 = por %p84, %p85
      %p87 = scmp.ne.s32.totalorder %s76, %s77
      %p88 = scmp.eq.s32.totalorder %s19, 0
      %p89 = por %p87, %p88
      %p90 = scmp.ne.s32.totalorder %s76, %s77
      %p91 = scmp.eq.s32.totalorder %s20, 1
      %p92 = por %p90, %p91
      %p94 = scmp.ne.s32.totalorder %s77, %s93
      %p95 = scmp.eq.s32.totalorder %s20, 0
      %p96 = por %p94, %p95
      %s98 = sadd.s32 %s97, 1
      %p101 = scmp.eq.s32.totalorder %s14, 1
      %p102 = scmp.ne.s32.totalorder %s97, %s99
      %p103 = scmp.eq.s32.totalorder %s14, 0
      %p104 = por %p102, %p103
      %p105 = scmp.ne.s32.totalorder %s97, %s99
      %p106 = scmp.eq.s32.totalorder %s19, 1
      %p107 = por %p105, %p106
      %p108 = scmp.ne.s32.totalorder %s99, %s100
      %p109 = scmp.eq.s32.totalorder %s19, 0
      %p110 = por %p108, %p109
      %p111 = scmp.ne.s32.totalorder %s99, %s100
      %p112 = scmp.eq.s32.totalorder %s20, 1
      %p113 = por %p111, %p112
      %p115 = scmp.ne.s32.totalorder %s100, %s114
      %p116 = scmp.eq.s32.totalorder %s20, 0
      %p117 = por %p115, %p116
      %s119 = sadd.s32 %s118, 1
      %p122 = scmp.eq.s32.totalorder %s14, 1
      %p123 = scmp.ne.s32.totalorder %s118, %s120
      %p124 = scmp.eq.s32.totalorder %s14, 0
      %p125 = por %p123, %p124
      %p126 = scmp.ne.s32.totalorder %s118, %s120
      %p127 = scmp.eq.s32.totalorder %s19, 1
      %p128 = por %p126, %p127
      %p129 = scmp.ne.s32.totalorder %s120, %s121
      %p130 = scmp.eq.s32.totalorder %s19, 0
      %p131 = por %p129, %p130
      %p132 = scmp.ne.s32.totalorder %s120, %s121
      %p133 = scmp.eq.s32.totalorder %s20, 1
      %p134 = por %p132, %p133
      %p136 = scmp.ne.s32.totalorder %s121, %s135
      %p137 = scmp.eq.s32.totalorder %s20, 0
      %p138 = por %p136, %p137
      %s140 = sadd.s32 %s139, 1
      %p143 = scmp.eq.s32.totalorder %s14, 1
      %p144 = scmp.ne.s32.totalorder %s139, %s141
      %p145 = scmp.eq.s32.totalorder %s14, 0
      %p146 = por %p144, %p145
      %p147 = scmp.ne.s32.totalorder %s139, %s141
      %p148 = scmp.eq.s32.totalorder %s19, 1
      %p149 = por %p147, %p148
      %p150 = scmp.ne.s32.totalorder %s141, %s142
      %p151 = scmp.eq.s32.totalorder %s19, 0
      %p152 = por %p150, %p151
      %p153 = scmp.ne.s32.totalorder %s141, %s142
      %p154 = scmp.eq.s32.totalorder %s20, 1
      %p155 = por %p153, %p154
      %p157 = scmp.ne.s32.totalorder %s142, %s156
      %p158 = scmp.eq.s32.totalorder %s20, 0
      %p159 = por %p157, %p158
      %s160 = ssub.s32 %s21, %s40
      %s161 = ssub.s32 %s22, %s36
      %s162 = sor.u32 %s160, %s161
      %p163 = scmp.eq.s32.totalorder %s162, 0
      %s165 = sadd.s32 %s164, 1
      %s166 = scalar_select %p163, %s164, %s165
      %p169 = pneg %p163
      %p170 = scmp.eq.s32.totalorder %s14, 1
      %p171 = por %p169, %p170
      %p172 = scmp.ne.s32.totalorder %s164, %s167
      %p173 = scmp.eq.s32.totalorder %s14, 0
      %p174 = por %p172, %p173
      %p175 = scmp.ne.s32.totalorder %s164, %s167
      %p176 = scmp.eq.s32.totalorder %s19, 1
      %p177 = por %p175, %p176
      %p178 = scmp.ne.s32.totalorder %s167, %s168
      %p179 = scmp.eq.s32.totalorder %s19, 0
      %p180 = por %p178, %p179
      %p181 = scmp.ne.s32.totalorder %s167, %s168
      %p182 = scmp.eq.s32.totalorder %s20, 1
      %p183 = por %p181, %p182
      %p185 = scmp.ne.s32.totalorder %s168, %s184
      %p186 = scmp.eq.s32.totalorder %s20, 0
      %p187 = por %p185, %p186
      %p188 = scmp.le.s32.totalorder 1, %s14
      %p189 = scmp.lt.s32.totalorder %s14, 3
      %p190 = pnand %p188, %p189
      %p191 = pneg %p190
      // Predicated region
      $region9: #{tpu_custom_call.1} parent=5 // pred_check
        _
      $region10: #{tpu_custom_call.1} parent=5 // pred_check_branch
        %193 = sbr.rel (%p190) target = $region12
      $region11: #{tpu_custom_call.1} parent=5 // pred_region
        %s194 = ssub.s32 %s14, 1
        // Predicated region
        $region13: #{tpu_custom_call.1} parent=11 // pred_check
          %p195 = pneg %p110
        $region14: #{tpu_custom_call.1} parent=11 // pred_check_branch
          %197 = sbr.rel (%p195) target = $region16
        $region15: #{tpu_custom_call.1} parent=11 // pred_region
          _
        $region16: #{tpu_custom_call.1} parent=11 // pred_fallthru
          _
        // Predicated region
        $region17: #{tpu_custom_call.1} parent=11 // pred_check
          %p198 = pneg %p131
        $region18: #{tpu_custom_call.1} parent=11 // pred_check_branch
          %200 = sbr.rel (%p198) target = $region20
        $region19: #{tpu_custom_call.1} parent=11 // pred_region
          _
        $region20: #{tpu_custom_call.1} parent=11 // pred_fallthru
          _
        // Predicated region
        $region21: #{tpu_custom_call.1} parent=11 // pred_check
          %p201 = pneg %p152
        $region22: #{tpu_custom_call.1} parent=11 // pred_check_branch
          %203 = sbr.rel (%p201) target = $region24
        $region23: #{tpu_custom_call.1} parent=11 // pred_region
          _
        $region24: #{tpu_custom_call.1} parent=11 // pred_fallthru
          _
      $region12: #{tpu_custom_call.1} parent=5 // pred_fallthru
        _
      %p204 = scmp.lt.s32.totalorder %s14, 2
      // Predicated region
      $region25: #{tpu_custom_call.1} parent=5 // pred_check
        %p205 = pneg %p204
      $region26: #{tpu_custom_call.1} parent=5 // pred_check_branch
        %207 = sbr.rel (%p205) target = $region28
      $region27: #{tpu_custom_call.1} parent=5 // pred_region
        // Predicated region
        $region29: #{tpu_custom_call.1} parent=27 // pred_check
          %p208 = pneg %p55
        $region30: #{tpu_custom_call.1} parent=27 // pred_check_branch
          %210 = sbr.rel (%p208) target = $region32
        $region31: #{tpu_custom_call.1} parent=27 // pred_region
          %p211 = scmp.lt.s32.totalorder %s21, 1
          %s212 = scalar_select %p211, %s21, 1
          %p213 = scmp.lt.s32.totalorder %s22, 0
          %s214 = scalar_select %p213, %s22, 0
          %s215 = sadd.s32 %s214, %s212
          %s216 = smul.addr %s215, 8
          %s217 = scalar_lea.vmem %s0, %s216
        $region32: #{tpu_custom_call.1} parent=27 // pred_fallthru
          _
        // Predicated region
        $region33: #{tpu_custom_call.1} parent=27 // pred_check
          %p218 = pneg %p83
        $region34: #{tpu_custom_call.1} parent=27 // pred_check_branch
          %220 = sbr.rel (%p218) target = $region36
        $region35: #{tpu_custom_call.1} parent=27 // pred_region
          %p221 = scmp.lt.s32.totalorder %s21, 1
          %s222 = scalar_select %p221, %s21, 1
          %p223 = scmp.lt.s32.totalorder %s23, 0
          %s224 = scalar_select %p223, %s23, 0
          %s225 = sadd.s32 %s224, %s222
          %s226 = smul.addr %s225, 4
          %s227 = scalar_lea.vmem %s1, %s226
        $region36: #{tpu_custom_call.1} parent=27 // pred_fallthru
          _
      $region28: #{tpu_custom_call.1} parent=5 // pred_fallthru
        _
      %p228 = scmp.le.s32.totalorder 1, %s14
      %p229 = scmp.lt.s32.totalorder %s14, 3
      %p230 = pnand %p228, %p229
      %p231 = pneg %p230
      // Predicated region
      $region37: #{tpu_custom_call.1} parent=5 // pred_check
        _
      $region38: #{tpu_custom_call.1} parent=5 // pred_check_branch
        %233 = sbr.rel (%p230) target = $region40
      $region39: #{tpu_custom_call.1} parent=5 // pred_region
        %s234 = ssub.s32 %s14, 1
        %p235 = scmp.lt.s32.totalorder %s24, 1
        %s236 = scalar_select %p235, %s24, 1
        %p237 = scmp.lt.s32.totalorder %s25, 0
        %s238 = scalar_select %p237, %s25, 0
        %s239 = sadd.s32 %s238, %s236
        %s240 = smul.addr %s239, 8
        %s241 = scalar_lea.vmem %s0, %s240
        %p242 = pneg %p61
        %p243 = pneg %p58
        %p244 = scmp.lt.s32.totalorder %s24, 1
        %s245 = scalar_select %p244, %s24, 1
        %p246 = scmp.lt.s32.totalorder %s26, 0
        %s247 = scalar_select %p246, %s26, 0
        %s248 = sadd.s32 %s247, %s245
        %s249 = smul.addr %s248, 4
        %s250 = scalar_lea.vmem %s1, %s249
        %p251 = pneg %p89
        %p252 = pneg %p86
        %p253 = pneg %p110
        %p254 = pneg %p107
        %p255 = pneg %p131
        %p256 = pneg %p128
        %p257 = pneg %p152
        %p258 = pneg %p149
        %p259 = pneg %p180
        %p260 = pneg %p177
        %s261 = sand.u32 %s167, 1
        %s262 = scalar_lea.sflag [#allocation7], %s261
        %s263 = sand.u32 %s167, 1
        %s264 = smul.addr %s263, 4
        %s265 = scalar_lea.vmem [#allocation6], %s264
        %p266 = scmp.lt.s32.totalorder %s24, 1
        %s267 = scalar_select %p266, %s24, 1
        %p268 = scmp.lt.s32.totalorder %s25, 0
        %s269 = scalar_select %p268, %s25, 0
        %s270 = sadd.s32 %s269, %s267
        %s271 = smul.addr %s270, 8
        %s272 = scalar_lea.vmem %s0, %s271
        %p273 = scmp.lt.s32.totalorder %s24, 1
        %s274 = scalar_select %p273, %s24, 1
        %p275 = scmp.lt.s32.totalorder %s26, 0
        %s276 = scalar_select %p275, %s26, 0
        %s277 = sadd.s32 %s276, %s274
        %s278 = smul.addr %s277, 4
        %s279 = scalar_lea.vmem %s1, %s278
        %p280 = scmp.eq.s32.totalorder %s26, 0
        // Predicated region
        $region41: #{tpu_custom_call.1} parent=39 // pred_check
          %p281 = pneg %p280
        $region42: #{tpu_custom_call.1} parent=39 // pred_check_branch
          %283 = sbr.rel (%p281) target = $region44
        $region43: #{tpu_custom_call.1} parent=39 // pred_region
          %v284 = vld [vmem:[%s272] sm:$0xff]
          %v285 = vld [vmem:[%s2] sm:$0xf]
          %vm286 = vcmask 31744
          %v288 = vsel %vm286, %v284, 0
          %vm290 = vcmask 1043456
          %v292 = vsel %vm290, %v285, 0
          %294 = vmatprep.subr.mxu0 0.0
          %295 = vmatpush1.msra.mxu0 %v292
          %296 = vmatprep.subr.mxu0 0.0
          %297 = vmatpush1.msra.mxu0 0.0
          %298 = vmatprep.subr.mxu0 0.0
          %299 = vmatpush1.msra.mxu0 0.0
          %300 = vmatprep.subr.mxu0 0.0
          %301 = vmatpush1.msra.mxu0 0.0
          %302 = vmatprep.subr.mxu0 0.0
          %303 = vmatpush1.msra.mxu0 0.0
          %304 = vmatprep.subr.mxu0 0.0
          %305 = vmatpush1.msra.mxu0 0.0
          %306 = vmatprep.subr.mxu0 0.0
          %307 = vmatpush1.msra.mxu0 0.0
          %308 = vmatprep.subr.mxu0 0.0
          %309 = vmatpush1.msra.mxu0 0.0
          %310 = vmatprep.subr.mxu0 0.0
          %311 = vmatpush1.msra.mxu0 0.0
          %312 = vmatprep.subr.mxu0 0.0
          %313 = vmatpush1.msra.mxu0 0.0
          %314 = vmatprep.subr.mxu0 0.0
          %315 = vmatpush1.msra.mxu0 0.0
          %316 = vmatprep.subr.mxu0 0.0
          %317 = vmatpush1.msra.mxu0 0.0
          %318 = vmatprep.subr.mxu0 0.0
          %319 = vmatpush1.msra.mxu0 0.0
          %320 = vmatprep.subr.mxu0 0.0
          %321 = vmatpush1.msra.mxu0 0.0
          %322 = vmatprep.subr.mxu0 0.0
          %323 = vmatpush1.msra.mxu0 0.0
          %324 = vmatprep.subr.mxu0 0.0
          %325 = vmatpush1.msra.mxu0 0.0
          %326 = vmatprep.subr.mxu0 0.0
          %327 = vmatpush1.msra.mxu0 0.0
          %328 = vmatprep.subr.mxu0 0.0
          %329 = vmatpush1.msra.mxu0 0.0
          %330 = vmatprep.subr.mxu0 0.0
          %331 = vmatpush1.msra.mxu0 0.0
          %332 = vmatprep.subr.mxu0 0.0
          %333 = vmatpush1.msra.mxu0 0.0
          %334 = vmatprep.subr.mxu0 0.0
          %335 = vmatpush1.msra.mxu0 0.0
          %336 = vmatprep.subr.mxu0 0.0
          %337 = vmatpush1.msra.mxu0 0.0
          %338 = vmatprep.subr.mxu0 0.0
          %339 = vmatpush1.msra.mxu0 0.0
          %340 = vmatprep.subr.mxu0 0.0
          %341 = vmatpush1.msra.mxu0 0.0
          %342 = vmatprep.subr.mxu0 0.0
          %343 = vmatpush1.msra.mxu0 0.0
          %344 = vmatprep.subr.mxu0 0.0
          %345 = vmatpush1.msra.mxu0 0.0
          %346 = vmatprep.subr.mxu0 0.0
          %347 = vmatpush1.msra.mxu0 0.0
          %348 = vmatprep.subr.mxu0 0.0
          %349 = vmatpush1.msra.mxu0 0.0
          %350 = vmatprep.subr.mxu0 0.0
          %351 = vmatpush1.msra.mxu0 0.0
          %352 = vmatprep.subr.mxu0 0.0
          %353 = vmatpush1.msra.mxu0 0.0
          %354 = vmatprep.subr.mxu0 0.0
          %355 = vmatpush1.msra.mxu0 0.0
          %356 = vmatprep.subr.mxu0 0.0
          %357 = vmatpush1.msra.mxu0 0.0
          %358 = vmatprep.mubr.f32.mxu0 0.0
          %359 = vmatmul.mubr.f32.gmra.mrb[0].mxu0 %v288
          %v360 = vpop.f32.mrb[0].mxu0
          %v361 = vadd.f32 0.0, %v360
          %v362 = vpop.f32.mrb[0].mxu0
          %363 = vdwg.mxu0
          %364 = vst.msk [vmem:[#allocation2] sm:$0xff] %vm286, %v361
          %vm365 = vcmask 7168
          %366 = vst.msk [vmem:[#allocation3] sm:$0xff] %vm365, -inf
          %367 = vst.msk [vmem:[#allocation3 + $0x8] sm:$0xff] %vm365, -inf
          %368 = vst.msk [vmem:[#allocation4] sm:$0xff] %vm365, 0.0
          %369 = vst.msk [vmem:[#allocation4 + $0x8] sm:$0xff] %vm365, 0.0
          %vm370 = vcmask 15360
          %371 = vst.msk [vmem:[#allocation5] sm:$0xff] %vm370, 0.0
          %372 = vst.msk [vmem:[#allocation5 + $0x8] sm:$0xff] %vm370, 0.0
        $region44: #{tpu_custom_call.1} parent=39 // pred_fallthru
          _
        %v373 = vld [vmem:[%s3] sm:$0xff]
        %v374 = vld [vmem:[%s279] sm:$0xf]
        %vm375 = vcmask 31744
        %v377 = vsel %vm375, %v373, 0
        %vm379 = vcmask 1043456
        %v381 = vsel %vm379, %v374, 0
        %383 = vmatprep.subr.mxu0 0.0
        %384 = vmatpush1.msra.mxu0 %v381
        %385 = vmatprep.subr.mxu0 0.0
        %386 = vmatpush1.msra.mxu0 0.0
        %387 = vmatprep.subr.mxu0 0.0
        %388 = vmatpush1.msra.mxu0 0.0
        %389 = vmatprep.subr.mxu0 0.0
        %390 = vmatpush1.msra.mxu0 0.0
        %391 = vmatprep.subr.mxu0 0.0
        %392 = vmatpush1.msra.mxu0 0.0
        %393 = vmatprep.subr.mxu0 0.0
        %394 = vmatpush1.msra.mxu0 0.0
        %395 = vmatprep.subr.mxu0 0.0
        %396 = vmatpush1.msra.mxu0 0.0
        %397 = vmatprep.subr.mxu0 0.0
        %398 = vmatpush1.msra.mxu0 0.0
        %399 = vmatprep.subr.mxu0 0.0
        %400 = vmatpush1.msra.mxu0 0.0
        %401 = vmatprep.subr.mxu0 0.0
        %402 = vmatpush1.msra.mxu0 0.0
        %403 = vmatprep.subr.mxu0 0.0
        %404 = vmatpush1.msra.mxu0 0.0
        %405 = vmatprep.subr.mxu0 0.0
        %406 = vmatpush1.msra.mxu0 0.0
        %407 = vmatprep.subr.mxu0 0.0
        %408 = vmatpush1.msra.mxu0 0.0
        %409 = vmatprep.subr.mxu0 0.0
        %410 = vmatpush1.msra.mxu0 0.0
        %411 = vmatprep.subr.mxu0 0.0
        %412 = vmatpush1.msra.mxu0 0.0
        %413 = vmatprep.subr.mxu0 0.0
        %414 = vmatpush1.msra.mxu0 0.0
        %415 = vmatprep.subr.mxu0 0.0
        %416 = vmatpush1.msra.mxu0 0.0
        %417 = vmatprep.subr.mxu0 0.0
        %418 = vmatpush1.msra.mxu0 0.0
        %419 = vmatprep.subr.mxu0 0.0
        %420 = vmatpush1.msra.mxu0 0.0
        %421 = vmatprep.subr.mxu0 0.0
        %422 = vmatpush1.msra.mxu0 0.0
        %423 = vmatprep.subr.mxu0 0.0
        %424 = vmatpush1.msra.mxu0 0.0
        %425 = vmatprep.subr.mxu0 0.0
        %426 = vmatpush1.msra.mxu0 0.0
        %427 = vmatprep.subr.mxu0 0.0
        %428 = vmatpush1.msra.mxu0 0.0
        %429 = vmatprep.subr.mxu0 0.0
        %430 = vmatpush1.msra.mxu0 0.0
        %431 = vmatprep.subr.mxu0 0.0
        %432 = vmatpush1.msra.mxu0 0.0
        %433 = vmatprep.subr.mxu0 0.0
        %434 = vmatpush1.msra.mxu0 0.0
        %435 = vmatprep.subr.mxu0 0.0
        %436 = vmatpush1.msra.mxu0 0.0
        %437 = vmatprep.subr.mxu0 0.0
        %438 = vmatpush1.msra.mxu0 0.0
        %439 = vmatprep.subr.mxu0 0.0
        %440 = vmatpush1.msra.mxu0 0.0
        %441 = vmatprep.subr.mxu0 0.0
        %442 = vmatpush1.msra.mxu0 0.0
        %443 = vmatprep.subr.mxu0 0.0
        %444 = vmatpush1.msra.mxu0 0.0
        %445 = vmatprep.subr.mxu0 0.0
        %446 = vmatpush1.msra.mxu0 0.0
        %447 = vmatprep.mubr.f32.mxu0 0.0
        %448 = vmatmul.mubr.f32.gmra.mrb[0].mxu0 %v377
        %v449 = vpop.f32.mrb[0].mxu0
        %v450 = vadd.f32 0.0, %v449
        %v451 = vpop.f32.mrb[0].mxu0
        %452 = vdwg.mxu0
        %v453 = vld [vmem:[#allocation2] sm:$0xff]
        %vm454 = vcmask 15360
        %v456 = vsel %vm454, %v453, 0
        %vm458 = vcmask 1041408
        %v460 = vsel %vm458, %v450, 0
        %462 = vmatprep.subr.mxu0 0.0
        %463 = vmatpush1.msra.mxu0 %v460
        %464 = vmatprep.subr.mxu0 0.0
        %465 = vmatpush1.msra.mxu0 0.0
        %466 = vmatprep.subr.mxu0 0.0
        %467 = vmatpush1.msra.mxu0 0.0
        %468 = vmatprep.subr.mxu0 0.0
        %469 = vmatpush1.msra.mxu0 0.0
        %470 = vmatprep.subr.mxu0 0.0
        %471 = vmatpush1.msra.mxu0 0.0
        %472 = vmatprep.subr.mxu0 0.0
        %473 = vmatpush1.msra.mxu0 0.0
        %474 = vmatprep.subr.mxu0 0.0
        %475 = vmatpush1.msra.mxu0 0.0
        %476 = vmatprep.subr.mxu0 0.0
        %477 = vmatpush1.msra.mxu0 0.0
        %478 = vmatprep.subr.mxu0 0.0
        %479 = vmatpush1.msra.mxu0 0.0
        %480 = vmatprep.subr.mxu0 0.0
        %481 = vmatpush1.msra.mxu0 0.0
        %482 = vmatprep.subr.mxu0 0.0
        %483 = vmatpush1.msra.mxu0 0.0
        %484 = vmatprep.subr.mxu0 0.0
        %485 = vmatpush1.msra.mxu0 0.0
        %486 = vmatprep.subr.mxu0 0.0
        %487 = vmatpush1.msra.mxu0 0.0
        %488 = vmatprep.subr.mxu0 0.0
        %489 = vmatpush1.msra.mxu0 0.0
        %490 = vmatprep.subr.mxu0 0.0
        %491 = vmatpush1.msra.mxu0 0.0
        %492 = vmatprep.subr.mxu0 0.0
        %493 = vmatpush1.msra.mxu0 0.0
        %494 = vmatprep.subr.mxu0 0.0
        %495 = vmatpush1.msra.mxu0 0.0
        %496 = vmatprep.subr.mxu0 0.0
        %497 = vmatpush1.msra.mxu0 0.0
        %498 = vmatprep.subr.mxu0 0.0
        %499 = vmatpush1.msra.mxu0 0.0
        %500 = vmatprep.subr.mxu0 0.0
        %501 = vmatpush1.msra.mxu0 0.0
        %502 = vmatprep.subr.mxu0 0.0
        %503 = vmatpush1.msra.mxu0 0.0
        %504 = vmatprep.subr.mxu0 0.0
        %505 = vmatpush1.msra.mxu0 0.0
        %506 = vmatprep.subr.mxu0 0.0
        %507 = vmatpush1.msra.mxu0 0.0
        %508 = vmatprep.subr.mxu0 0.0
        %509 = vmatpush1.msra.mxu0 0.0
        %510 = vmatprep.subr.mxu0 0.0
        %511 = vmatpush1.msra.mxu0 0.0
        %512 = vmatprep.subr.mxu0 0.0
        %513 = vmatpush1.msra.mxu0 0.0
        %514 = vmatprep.subr.mxu0 0.0
        %515 = vmatpush1.msra.mxu0 0.0
        %516 = vmatprep.subr.mxu0 0.0
        %517 = vmatpush1.msra.mxu0 0.0
        %518 = vmatprep.subr.mxu0 0.0
        %519 = vmatpush1.msra.mxu0 0.0
        %520 = vmatprep.subr.mxu0 0.0
        %521 = vmatpush1.msra.mxu0 0.0
        %522 = vmatprep.subr.mxu0 0.0
        %523 = vmatpush1.msra.mxu0 0.0
        %524 = vmatprep.subr.mxu0 0.0
        %525 = vmatpush1.msra.mxu0 0.0
        %526 = vmatprep.mubr.f32.mxu0 0.0
        %527 = vmatmul.mubr.f32.gmra.mrb[0].mxu0 %v456
        %v528 = vpop.f32.mrb[0].mxu0
        %v529 = vadd.f32 0.0, %v528
        %v530 = vpop.f32.mrb[0].mxu0
        %531 = vdwg.mxu0
        %v532 = vld [vmem:[#allocation3] sm:$0xff]
        %vm533 = vcmask 130048
        %v534 = vsel %vm533, %v529, -inf
        %535 = vmax.xlane.f32.xlu0 %v534
        %v536 = vpop.xlane.xlu0 %535
        %v537 = vmax.f32 %v532, %v536
        %v538 = vsub.f32 %v532, %v537
        %v539 = vmul.f32 %v538, 1.442695
        %v540 = vpow.pop %v539
        %542 = vset.pattern.permute.xlu0 0
        %543 = vperm.xlu0 %542, %v537
        %v544 = vpop.permute.xlu0 %543
        %v546 = vsub.f32 %v529, %v544
        %v547 = vmul.f32 %v546, 1.442695
        %v548 = vpow.pop %v547
        %v549 = vld [vmem:[#allocation4] sm:$0xff]
        %v550 = vmul.f32 %v540, %v549
        %v551 = vsel %vm533, %v548, 0.0
        %552 = vadd.xlane.f32.xlu0 %v551
        %v553 = vpop.xlane.xlu0 %552
        %v554 = vadd.f32 %v550, %v553
        %vm555 = vcmask 7168
        %556 = vst.msk [vmem:[#allocation4] sm:$0xff] %vm555, %v554
        %557 = vst.msk [vmem:[#allocation3] sm:$0xff] %vm555, %v537
        %v558 = vrot.slane %v450, 4
        %v560 = vsel %vm533, %v548, 0
        %v562 = vsel %vm533, %v558, 0
        %564 = vmatprep.subr.mxu0 0.0
        %565 = vmatpush1.xpose.msra.mxu0 %v562
        %566 = vmatprep.subr.mxu0 0.0
        %567 = vmatpush1.xpose.msra.mxu0 0.0
        %568 = vmatprep.subr.mxu0 0.0
        %569 = vmatpush1.xpose.msra.mxu0 0.0
        %570 = vmatprep.subr.mxu0 0.0
        %571 = vmatpush1.xpose.msra.mxu0 0.0
        %572 = vmatprep.subr.mxu0 0.0
        %573 = vmatpush1.xpose.msra.mxu0 0.0
        %574 = vmatprep.subr.mxu0 0.0
        %575 = vmatpush1.xpose.msra.mxu0 0.0
        %576 = vmatprep.subr.mxu0 0.0
        %577 = vmatpush1.xpose.msra.mxu0 0.0
        %578 = vmatprep.subr.mxu0 0.0
        %579 = vmatpush1.xpose.msra.mxu0 0.0
        %580 = vmatprep.subr.mxu0 0.0
        %581 = vmatpush1.xpose.msra.mxu0 0.0
        %582 = vmatprep.subr.mxu0 0.0
        %583 = vmatpush1.xpose.msra.mxu0 0.0
        %584 = vmatprep.subr.mxu0 0.0
        %585 = vmatpush1.xpose.msra.mxu0 0.0
        %586 = vmatprep.subr.mxu0 0.0
        %587 = vmatpush1.xpose.msra.mxu0 0.0
        %588 = vmatprep.subr.mxu0 0.0
        %589 = vmatpush1.xpose.msra.mxu0 0.0
        %590 = vmatprep.subr.mxu0 0.0
        %591 = vmatpush1.xpose.msra.mxu0 0.0
        %592 = vmatprep.subr.mxu0 0.0
        %593 = vmatpush1.xpose.msra.mxu0 0.0
        %594 = vmatprep.subr.mxu0 0.0
        %595 = vmatpush1.xpose.msra.mxu0 0.0
        %596 = vmatprep.subr.mxu0 0.0
        %597 = vmatpush1.xpose.msra.mxu0 0.0
        %598 = vmatprep.subr.mxu0 0.0
        %599 = vmatpush1.xpose.msra.mxu0 0.0
        %600 = vmatprep.subr.mxu0 0.0
        %601 = vmatpush1.xpose.msra.mxu0 0.0
        %602 = vmatprep.subr.mxu0 0.0
        %603 = vmatpush1.xpose.msra.mxu0 0.0
        %604 = vmatprep.subr.mxu0 0.0
        %605 = vmatpush1.xpose.msra.mxu0 0.0
        %606 = vmatprep.subr.mxu0 0.0
        %607 = vmatpush1.xpose.msra.mxu0 0.0
        %608 = vmatprep.subr.mxu0 0.0
        %609 = vmatpush1.xpose.msra.mxu0 0.0
        %610 = vmatprep.subr.mxu0 0.0
        %611 = vmatpush1.xpose.msra.mxu0 0.0
        %612 = vmatprep.subr.mxu0 0.0
        %613 = vmatpush1.xpose.msra.mxu0 0.0
        %614 = vmatprep.subr.mxu0 0.0
        %615 = vmatpush1.xpose.msra.mxu0 0.0
        %616 = vmatprep.subr.mxu0 0.0
        %617 = vmatpush1.xpose.msra.mxu0 0.0
        %618 = vmatprep.subr.mxu0 0.0
        %619 = vmatpush1.xpose.msra.mxu0 0.0
        %620 = vmatprep.subr.mxu0 0.0
        %621 = vmatpush1.xpose.msra.mxu0 0.0
        %622 = vmatprep.subr.mxu0 0.0
        %623 = vmatpush1.xpose.msra.mxu0 0.0
        %624 = vmatprep.subr.mxu0 0.0
        %625 = vmatpush1.xpose.msra.mxu0 0.0
        %626 = vmatprep.subr.mxu0 0.0
        %627 = vmatpush1.xpose.msra.mxu0 0.0
        %628 = vmatprep.mubr.f32.mxu0 0.0
        %629 = vmatmul.mubr.f32.gmra.mrb[0].mxu0 %v560
        %v630 = vpop.f32.mrb[0].mxu0
        %v631 = vadd.f32 0.0, %v630
        %v632 = vpop.f32.mrb[0].mxu0
        %633 = vdwg.mxu0
        %v634 = vld [vmem:[#allocation5] sm:$0xff]
        %636 = vset.pattern.permute.xlu0 0
        %637 = vperm.xlu0 %636, %v540
        %v638 = vpop.permute.xlu0 %637
        %v640 = vmul.f32 %v638, %v634
        %v641 = vadd.f32 %v640, %v631
        %642 = vst.msk [vmem:[#allocation5] sm:$0xff] %vm454, %v641
        %643 = vrot.lane.b32.xlu0 %v453, 126
        %v644 = vpop.permute.xlu0 %643
        %v645 = vrot.slane %v450, 2
        %v646 = vsel %vm454, %v644, 0
        %v648 = vsel %vm458, %v645, 0
        %650 = vmatprep.subr.mxu0 0.0
        %651 = vmatpush1.msra.mxu0 %v648
        %652 = vmatprep.subr.mxu0 0.0
        %653 = vmatpush1.msra.mxu0 0.0
        %654 = vmatprep.subr.mxu0 0.0
        %655 = vmatpush1.msra.mxu0 0.0
        %656 = vmatprep.subr.mxu0 0.0
        %657 = vmatpush1.msra.mxu0 0.0
        %658 = vmatprep.subr.mxu0 0.0
        %659 = vmatpush1.msra.mxu0 0.0
        %660 = vmatprep.subr.mxu0 0.0
        %661 = vmatpush1.msra.mxu0 0.0
        %662 = vmatprep.subr.mxu0 0.0
        %663 = vmatpush1.msra.mxu0 0.0
        %664 = vmatprep.subr.mxu0 0.0
        %665 = vmatpush1.msra.mxu0 0.0
        %666 = vmatprep.subr.mxu0 0.0
        %667 = vmatpush1.msra.mxu0 0.0
        %668 = vmatprep.subr.mxu0 0.0
        %669 = vmatpush1.msra.mxu0 0.0
        %670 = vmatprep.subr.mxu0 0.0
        %671 = vmatpush1.msra.mxu0 0.0
        %672 = vmatprep.subr.mxu0 0.0
        %673 = vmatpush1.msra.mxu0 0.0
        %674 = vmatprep.subr.mxu0 0.0
        %675 = vmatpush1.msra.mxu0 0.0
        %676 = vmatprep.subr.mxu0 0.0
        %677 = vmatpush1.msra.mxu0 0.0
        %678 = vmatprep.subr.mxu0 0.0
        %679 = vmatpush1.msra.mxu0 0.0
        %680 = vmatprep.subr.mxu0 0.0
        %681 = vmatpush1.msra.mxu0 0.0
        %682 = vmatprep.subr.mxu0 0.0
        %683 = vmatpush1.msra.mxu0 0.0
        %684 = vmatprep.subr.mxu0 0.0
        %685 = vmatpush1.msra.mxu0 0.0
        %686 = vmatprep.subr.mxu0 0.0
        %687 = vmatpush1.msra.mxu0 0.0
        %688 = vmatprep.subr.mxu0 0.0
        %689 = vmatpush1.msra.mxu0 0.0
        %690 = vmatprep.subr.mxu0 0.0
        %691 = vmatpush1.msra.mxu0 0.0
        %692 = vmatprep.subr.mxu0 0.0
        %693 = vmatpush1.msra.mxu0 0.0
        %694 = vmatprep.subr.mxu0 0.0
        %695 = vmatpush1.msra.mxu0 0.0
        %696 = vmatprep.subr.mxu0 0.0
        %697 = vmatpush1.msra.mxu0 0.0
        %698 = vmatprep.subr.mxu0 0.0
        %699 = vmatpush1.msra.mxu0 0.0
        %700 = vmatprep.subr.mxu0 0.0
        %701 = vmatpush1.msra.mxu0 0.0
        %702 = vmatprep.subr.mxu0 0.0
        %703 = vmatpush1.msra.mxu0 0.0
        %704 = vmatprep.subr.mxu0 0.0
        %705 = vmatpush1.msra.mxu0 0.0
        %706 = vmatprep.subr.mxu0 0.0
        %707 = vmatpush1.msra.mxu0 0.0
        %708 = vmatprep.subr.mxu0 0.0
        %709 = vmatpush1.msra.mxu0 0.0
        %710 = vmatprep.subr.mxu0 0.0
        %711 = vmatpush1.msra.mxu0 0.0
        %712 = vmatprep.subr.mxu0 0.0
        %713 = vmatpush1.msra.mxu0 0.0
        %714 = vmatprep.mubr.f32.mxu0 0.0
        %715 = vmatmul.mubr.f32.gmra.mrb[0].mxu0 %v646
        %v716 = vpop.f32.mrb[0].mxu0
        %v717 = vadd.f32 0.0, %v716
        %v718 = vpop.f32.mrb[0].mxu0
        %719 = vdwg.mxu0
        %s720 = scalar_lea.vmem [#allocation3], 8
        %v721 = vld [vmem:[%s720] sm:$0xff]
        %v722 = vsel %vm533, %v717, -inf
        %723 = vmax.xlane.f32.xlu0 %v722
        %v724 = vpop.xlane.xlu0 %723
        %v725 = vmax.f32 %v721, %v724
        %v726 = vsub.f32 %v721, %v725
        %v727 = vmul.f32 %v726, 1.442695
        %v728 = vpow.pop %v727
        %730 = vset.pattern.permute.xlu0 0
        %731 = vperm.xlu0 %730, %v725
        %v732 = vpop.permute.xlu0 %731
        %v734 = vsub.f32 %v717, %v732
        %v735 = vmul.f32 %v734, 1.442695
        %v736 = vpow.pop %v735
        %s737 = scalar_lea.vmem [#allocation4], 8
        %v738 = vld [vmem:[%s737] sm:$0xff]
        %v739 = vmul.f32 %v728, %v738
        %v740 = vsel %vm533, %v736, 0.0
        %741 = vadd.xlane.f32.xlu0 %v740
        %v742 = vpop.xlane.xlu0 %741
        %v743 = vadd.f32 %v739, %v742
        %744 = vst.msk [vmem:[%s737] sm:$0xff] %vm555, %v743
        %745 = vst.msk [vmem:[%s720] sm:$0xff] %vm555, %v725
        %v746 = vrot.slane %v450, 6
        %v748 = vsel %vm533, %v736, 0
        %v750 = vsel %vm533, %v746, 0
        %752 = vmatprep.subr.mxu0 0.0
        %753 = vmatpush1.xpose.msra.mxu0 %v750
        %754 = vmatprep.subr.mxu0 0.0
        %755 = vmatpush1.xpose.msra.mxu0 0.0
        %756 = vmatprep.subr.mxu0 0.0
        %757 = vmatpush1.xpose.msra.mxu0 0.0
        %758 = vmatprep.subr.mxu0 0.0
        %759 = vmatpush1.xpose.msra.mxu0 0.0
        %760 = vmatprep.subr.mxu0 0.0
        %761 = vmatpush1.xpose.msra.mxu0 0.0
        %762 = vmatprep.subr.mxu0 0.0
        %763 = vmatpush1.xpose.msra.mxu0 0.0
        %764 = vmatprep.subr.mxu0 0.0
        %765 = vmatpush1.xpose.msra.mxu0 0.0
        %766 = vmatprep.subr.mxu0 0.0
        %767 = vmatpush1.xpose.msra.mxu0 0.0
        %768 = vmatprep.subr.mxu0 0.0
        %769 = vmatpush1.xpose.msra.mxu0 0.0
        %770 = vmatprep.subr.mxu0 0.0
        %771 = vmatpush1.xpose.msra.mxu0 0.0
        %772 = vmatprep.subr.mxu0 0.0
        %773 = vmatpush1.xpose.msra.mxu0 0.0
        %774 = vmatprep.subr.mxu0 0.0
        %775 = vmatpush1.xpose.msra.mxu0 0.0
        %776 = vmatprep.subr.mxu0 0.0
        %777 = vmatpush1.xpose.msra.mxu0 0.0
        %778 = vmatprep.subr.mxu0 0.0
        %779 = vmatpush1.xpose.msra.mxu0 0.0
        %780 = vmatprep.subr.mxu0 0.0
        %781 = vmatpush1.xpose.msra.mxu0 0.0
        %782 = vmatprep.subr.mxu0 0.0
        %783 = vmatpush1.xpose.msra.mxu0 0.0
        %784 = vmatprep.subr.mxu0 0.0
        %785 = vmatpush1.xpose.msra.mxu0 0.0
        %786 = vmatprep.subr.mxu0 0.0
        %787 = vmatpush1.xpose.msra.mxu0 0.0
        %788 = vmatprep.subr.mxu0 0.0
        %789 = vmatpush1.xpose.msra.mxu0 0.0
        %790 = vmatprep.subr.mxu0 0.0
        %791 = vmatpush1.xpose.msra.mxu0 0.0
        %792 = vmatprep.subr.mxu0 0.0
        %793 = vmatpush1.xpose.msra.mxu0 0.0
        %794 = vmatprep.subr.mxu0 0.0
        %795 = vmatpush1.xpose.msra.mxu0 0.0
        %796 = vmatprep.subr.mxu0 0.0
        %797 = vmatpush1.xpose.msra.mxu0 0.0
        %798 = vmatprep.subr.mxu0 0.0
        %799 = vmatpush1.xpose.msra.mxu0 0.0
        %800 = vmatprep.subr.mxu0 0.0
        %801 = vmatpush1.xpose.msra.mxu0 0.0
        %802 = vmatprep.subr.mxu0 0.0
        %803 = vmatpush1.xpose.msra.mxu0 0.0
        %804 = vmatprep.subr.mxu0 0.0
        %805 = vmatpush1.xpose.msra.mxu0 0.0
        %806 = vmatprep.subr.mxu0 0.0
        %807 = vmatpush1.xpose.msra.mxu0 0.0
        %808 = vmatprep.subr.mxu0 0.0
        %809 = vmatpush1.xpose.msra.mxu0 0.0
        %810 = vmatprep.subr.mxu0 0.0
        %811 = vmatpush1.xpose.msra.mxu0 0.0
        %812 = vmatprep.subr.mxu0 0.0
        %813 = vmatpush1.xpose.msra.mxu0 0.0
        %814 = vmatprep.subr.mxu0 0.0
        %815 = vmatpush1.xpose.msra.mxu0 0.0
        %816 = vmatprep.mubr.f32.mxu0 0.0
        %817 = vmatmul.mubr.f32.gmra.mrb[0].mxu0 %v748
        %v818 = vpop.f32.mrb[0].mxu0
        %v819 = vadd.f32 0.0, %v818
        %v820 = vpop.f32.mrb[0].mxu0
        %821 = vdwg.mxu0
        %s822 = scalar_lea.vmem [#allocation5], 8
        %v823 = vld [vmem:[%s822] sm:$0xff]
        %825 = vset.pattern.permute.xlu0 0
        %826 = vperm.xlu0 %825, %v728
        %v827 = vpop.permute.xlu0 %826
        %v829 = vmul.f32 %v827, %v823
        %v830 = vadd.f32 %v829, %v819
        %831 = vst.msk [vmem:[%s822] sm:$0xff] %vm454, %v830
        // Predicated region
        $region45: #{tpu_custom_call.1} parent=39 // pred_check
          %p832 = pneg %p280
        $region46: #{tpu_custom_call.1} parent=39 // pred_check_branch
          %834 = sbr.rel (%p832) target = $region48
        $region47: #{tpu_custom_call.1} parent=39 // pred_region
          %v835 = vld [vmem:[#allocation4] sm:$0xff]
          %v836 = vrcp.pop %v835
          %v837 = vld [vmem:[#allocation5] sm:$0xff]
          %839 = vset.pattern.permute.xlu0 0
          %840 = vperm.xlu0 %839, %v836
          %v841 = vpop.permute.xlu0 %840
          %v843 = vmul.f32 %v837, %v841
          %v844 = vld [vmem:[%s737] sm:$0xff]
          %v845 = vrcp.pop %v844
          %v846 = vld [vmem:[%s822] sm:$0xff]
          %848 = vset.pattern.permute.xlu0 0
          %849 = vperm.xlu0 %848, %v845
          %v850 = vpop.permute.xlu0 %849
          %v852 = vmul.f32 %v846, %v850
          %854 = vrot.lane.b32.xlu0 %v852, 2
          %v855 = vpop.permute.xlu0 %854
          %v857 = vsel %vm454, %v843, %v855
          %v858 = vld [vmem:[%s4] sm:$0xf]
          %v860 = vsel %vm375, %v858, 0
          %v863 = vsel %vm375, %v857, 0
          %865 = vmatprep.subr.mxu0 0.0
          %866 = vmatpush1.xpose.msra.mxu0 %v863
          %867 = vmatprep.subr.mxu0 0.0
          %868 = vmatpush1.xpose.msra.mxu0 0.0
          %869 = vmatprep.subr.mxu0 0.0
          %870 = vmatpush1.xpose.msra.mxu0 0.0
          %871 = vmatprep.subr.mxu0 0.0
          %872 = vmatpush1.xpose.msra.mxu0 0.0
          %873 = vmatprep.subr.mxu0 0.0
          %874 = vmatpush1.xpose.msra.mxu0 0.0
          %875 = vmatprep.subr.mxu0 0.0
          %876 = vmatpush1.xpose.msra.mxu0 0.0
          %877 = vmatprep.subr.mxu0 0.0
          %878 = vmatpush1.xpose.msra.mxu0 0.0
          %879 = vmatprep.subr.mxu0 0.0
          %880 = vmatpush1.xpose.msra.mxu0 0.0
          %881 = vmatprep.subr.mxu0 0.0
          %882 = vmatpush1.xpose.msra.mxu0 0.0
          %883 = vmatprep.subr.mxu0 0.0
          %884 = vmatpush1.xpose.msra.mxu0 0.0
          %885 = vmatprep.subr.mxu0 0.0
          %886 = vmatpush1.xpose.msra.mxu0 0.0
          %887 = vmatprep.subr.mxu0 0.0
          %888 = vmatpush1.xpose.msra.mxu0 0.0
          %889 = vmatprep.subr.mxu0 0.0
          %890 = vmatpush1.xpose.msra.mxu0 0.0
          %891 = vmatprep.subr.mxu0 0.0
          %892 = vmatpush1.xpose.msra.mxu0 0.0
          %893 = vmatprep.subr.mxu0 0.0
          %894 = vmatpush1.xpose.msra.mxu0 0.0
          %895 = vmatprep.subr.mxu0 0.0
          %896 = vmatpush1.xpose.msra.mxu0 0.0
          %897 = vmatprep.subr.mxu0 0.0
          %898 = vmatpush1.xpose.msra.mxu0 0.0
          %899 = vmatprep.subr.mxu0 0.0
          %900 = vmatpush1.xpose.msra.mxu0 0.0
          %901 = vmatprep.subr.mxu0 0.0
          %902 = vmatpush1.xpose.msra.mxu0 0.0
          %903 = vmatprep.subr.mxu0 0.0
          %904 = vmatpush1.xpose.msra.mxu0 0.0
          %905 = vmatprep.subr.mxu0 0.0
          %906 = vmatpush1.xpose.msra.mxu0 0.0
          %907 = vmatprep.subr.mxu0 0.0
          %908 = vmatpush1.xpose.msra.mxu0 0.0
          %909 = vmatprep.subr.mxu0 0.0
          %910 = vmatpush1.xpose.msra.mxu0 0.0
          %911 = vmatprep.subr.mxu0 0.0
          %912 = vmatpush1.xpose.msra.mxu0 0.0
          %913 = vmatprep.subr.mxu0 0.0
          %914 = vmatpush1.xpose.msra.mxu0 0.0
          %915 = vmatprep.subr.mxu0 0.0
          %916 = vmatpush1.xpose.msra.mxu0 0.0
          %917 = vmatprep.subr.mxu0 0.0
          %918 = vmatpush1.xpose.msra.mxu0 0.0
          %919 = vmatprep.subr.mxu0 0.0
          %920 = vmatpush1.xpose.msra.mxu0 0.0
          %921 = vmatprep.subr.mxu0 0.0
          %922 = vmatpush1.xpose.msra.mxu0 0.0
          %923 = vmatprep.subr.mxu0 0.0
          %924 = vmatpush1.xpose.msra.mxu0 0.0
          %925 = vmatprep.subr.mxu0 0.0
          %926 = vmatpush1.xpose.msra.mxu0 0.0
          %927 = vmatprep.subr.mxu0 0.0
          %928 = vmatpush1.xpose.msra.mxu0 0.0
          %929 = vmatprep.mubr.f32.mxu0 0.0
          %930 = vmatmul.mubr.f32.gmra.mrb[0].mxu0 %v860
          %v931 = vpop.f32.mrb[0].mxu0
          %v932 = vadd.f32 0.0, %v931
          %v933 = vpop.f32.mrb[0].mxu0
          %934 = vdwg.mxu0
          %vm935 = vcmask 60416
          %936 = vst.msk [vmem:[%s265] sm:$0xf] %vm935, %v932
        $region48: #{tpu_custom_call.1} parent=39 // pred_fallthru
          _
        %s937 = sand.u32 %s167, 1
        %s938 = scalar_lea.sflag [#allocation7], %s937
        %s939 = sand.u32 %s167, 1
        %s940 = smul.addr %s939, 4
        %s941 = scalar_lea.vmem [#allocation6], %s940
        // Predicated region
        $region49: #{tpu_custom_call.1} parent=39 // pred_check
          %p942 = pneg %p177
        $region50: #{tpu_custom_call.1} parent=39 // pred_check_branch
          %944 = sbr.rel (%p942) target = $region52
        $region51: #{tpu_custom_call.1} parent=39 // pred_region
          %s946 = ssub.s32 64, 64
          %947 = vsyncadd %s938, %s946
          %s948 = sadd.s32 %s25, %s24
          %s949 = smul.addr %s948, 64
          %s950 = scalar_lea.hbm %s5, %s949
          %s952 = sshll.u32 %s941, 4
          %s953 = int_to_ptr.vmem [resolvable:$true] %s952
          %955 = dma.vmem_to_hbm [thread:$0]  %s953, 64, %s950, %s938
        $region52: #{tpu_custom_call.1} parent=39 // pred_fallthru
          _
      $region40: #{tpu_custom_call.1} parent=5 // pred_fallthru
        _
      %p956 = scmp.le.s32.totalorder 2, %s14
      // Predicated region
      $region53: #{tpu_custom_call.1} parent=5 // pred_check
        %p957 = pneg %p956
      $region54: #{tpu_custom_call.1} parent=5 // pred_check_branch
        %959 = sbr.rel (%p957) target = $region56
      $region55: #{tpu_custom_call.1} parent=5 // pred_region
        %s960 = ssub.s32 %s14, 2
        // Predicated region
        $region57: #{tpu_custom_call.1} parent=55 // pred_check
          %p961 = pneg %p183
        $region58: #{tpu_custom_call.1} parent=55 // pred_check_branch
          %963 = sbr.rel (%p961) target = $region60
        $region59: #{tpu_custom_call.1} parent=55 // pred_region
          %s964 = sand.u32 %s168, 1
          %s965 = scalar_lea.sflag [#allocation7], %s964
          %s966 = sand.u32 %s168, 1
          %s967 = smul.addr %s966, 4
          %s968 = scalar_lea.vmem [#allocation6], %s967
          %969 = dma.done %s965, 64
        $region60: #{tpu_custom_call.1} parent=55 // pred_fallthru
          _
      $region56: #{tpu_custom_call.1} parent=5 // pred_fallthru
        _
    $region6: #{tpu_custom_call.1} parent=1 // loop_footer
      %s18 = sadd.s32 1, %s14
    $region7: #{tpu_custom_call.1} parent=1 // loop_footer_branch
      %13 = sbr.rel target = $region3
    $region8: #{tpu_custom_call.1} parent=1 // loop_exit
      _
    %970 = vsyncpa [#allocation7], 1
    %s971 = scalar_lea.sflag [#allocation7], 1
    %972 = vsyncpa %s971, 1

</llo_original>
